<compile_context>
chip_gen: v6e
topology: v6e:2x2x1
jax: 0.10.0
libtpu: 0.0.40
codegen_flags: <defaults>
</compile_context>

<pallas_src>
import jax
import jax.numpy as jnp
from jax.experimental import pallas as pl
from jax.experimental.pallas import tpu as pltpu


def _round_up(n, m):
    return ((n + m - 1) // m) * m


def make_ann_kernel(n_layers, n_out, bias_slices, matmul_dtype):
    """Build the fused MLP kernel (feature-major layout, batch on lanes).

    Kernel ref layout:
      x_ref   : (batch_tile, in_features)                 float32 (natural layout)
      w_i     : (out_i, in_i)   (PyTorch layout)          matmul_dtype
      w_out   : (h_last, 1) if n_out == 1 else (n_out, h_last)
      b_all   : (sum(round_up(out_i, 8)), 1)              float32 (all biases packed)
      o_ref   : (n_out, batch_tile)                       float32

    bias_slices[i] = (row_offset, rows) of layer i's bias inside b_all; the
    last entry is the output layer's bias.
    """

    def kernel(x_ref, *rest):
        o_ref = rest[-1]
        b_ref = rest[-2]
        w_refs = rest[:n_layers]
        wo_ref = rest[n_layers]

        # First layer: cast x in-kernel and contract the feature dims
        # (trans-B style).  Result is feature-major (out0, batch_tile), i.e.
        # batch lands on the lane axis; any residual transpose Mosaic inserts
        # runs in otherwise-idle XLU slots.
        x = x_ref[...].astype(matmul_dtype)                 # (bt, F)
        h = jax.lax.dot_general(
            w_refs[0][...], x,
            dimension_numbers=(((1,), (1,)), ((), ())),
            preferred_element_type=jnp.float32)             # (out0, bt) f32
        off, sz = bias_slices[0]
        h = jnp.maximum(h + b_ref[off:off + sz, :], 0.0)    # f32 epilogue (VPU)

        for i in range(1, n_layers):
            w = w_refs[i][...]                              # (out_i, in_i)
            h = jnp.dot(w, h.astype(matmul_dtype),
                        preferred_element_type=jnp.float32)
            off, sz = bias_slices[i]
            h = jnp.maximum(h + b_ref[off:off + sz, :], 0.0)

        # Dropout(p=0) is the identity at inference -> nothing to do.
        # TODO(synk): training-mode dropout with p>0 would need pltpu.prng_* masking.

        off, sz = bias_slices[n_layers]
        bo = b_ref[off:off + sz, :]                         # (n_out, 1) f32
        wo = wo_ref[...]
        if n_out == 1:
            # (h_last, bt) * (h_last, 1) broadcast + sublane reduce: runs in
            # otherwise-idle VPU/XLU slots, avoids a 1-lane MXU matmul.
            o = jnp.sum(h * wo, axis=0, keepdims=True) + bo
        else:
            o = jnp.dot(wo, h.astype(matmul_dtype),
                        preferred_element_type=jnp.float32) + bo
        o_ref[...] = jax.nn.sigmoid(o)                      # EUP

    return kernel


def _choose_batch_tile(B, batch_tile):
    """Lane-dense batch tiling with >=2 grid steps when there is enough work."""
    bt = max(128, _round_up(batch_tile, 128))
    full = _round_up(B, 128)      # smallest legal single tile covering B
    if full <= bt:
        if full >= 256:
            # Split into (at least) two tiles so both v7x TensorCores get work.
            bt = _round_up((full + 1) // 2, 128)
        else:
            bt = full             # 128: one tiny tile is all there is
    return bt


def ann_forward(x, params, *, batch_tile=2048, matmul_dtype=jnp.bfloat16):
    """Fused ANN forward pass as a single Pallas kernel.

    x      : (B, in_features) float32
    params : dict with, for i in range(n_layers):
               w{i}  : (out_i, in_i)   (PyTorch nn.Linear layout)
               b{i}  : (out_i, 1)
             plus    w_out : (n_out, h_last), b_out : (n_out, 1)
    Returns (B, n_out) float32.
    """
    B, in_features = x.shape
    n_layers = 0
    while f"w{n_layers}" in params:
        n_layers += 1
    assert n_layers >= 1
    n_out, h_last = params["w_out"].shape

    bt = _choose_batch_tile(B, batch_tile)
    grid = (pl.cdiv(B, bt),)

    # ---- Build operands + specs --------------------------------------------
    args = [x]                                               # natural layout, f32
    in_specs = [pl.BlockSpec((bt, in_features), lambda i: (i, 0))]

    def _resident(a):
        # Full-array block with a constant index map: stays resident in VMEM
        # across all grid steps (no re-DMA).
        args.append(a)
        in_specs.append(pl.BlockSpec(a.shape, lambda i: (0, 0)))

    hidden_widths = []
    weight_bytes = 0
    for i in range(n_layers):
        w = params[f"w{i}"].astype(matmul_dtype)
        hidden_widths.append(w.shape[0])
        weight_bytes += w.size * jnp.dtype(matmul_dtype).itemsize
        _resident(w)
    if n_out == 1:
        wo = params["w_out"].T.astype(jnp.float32)           # (h_last, 1), VPU path
    else:
        wo = params["w_out"].astype(matmul_dtype)             # (n_out, h_last), MXU path
    weight_bytes += wo.size * wo.dtype.itemsize
    _resident(wo)

    # Pack all biases into one resident operand (8-row aligned static slices).
    bias_arrays = [params[f"b{i}"] for i in range(n_layers)] + [params["b_out"]]
    bias_slices, chunks, off = [], [], 0
    for b in bias_arrays:
        b = jnp.asarray(b, jnp.float32).reshape(-1, 1)
        sz = b.shape[0]
        szp = _round_up(sz, 8)
        if szp > sz:
            b = jnp.pad(b, ((0, szp - sz), (0, 0)))
        chunks.append(b)
        bias_slices.append((off, sz))
        off += szp
    b_all = jnp.concatenate(chunks, axis=0)                   # (off, 1) f32
    _resident(b_all)

    # ---- VMEM budget (only matters for aggressive batch_tile sweeps) --------
    max_w = max([in_features] + hidden_widths)
    est = (2 * bt * in_features * 4          # x tile, double buffered, f32
           + 2 * n_out * bt * 4              # out tile, double buffered
           + 2 * weight_bytes + 2 * b_all.size * 4
           + 6 * bt * max_w * 4)             # live h intermediates + headroom
    vmem_limit = None
    if est > 12 * 1024 * 1024:               # above v5e's 16 MiB default, add slack
        vmem_limit = min(_round_up(int(est * 1.5), 1 << 20), 48 << 20)

    out_t = pl.pallas_call(
        make_ann_kernel(n_layers, n_out, bias_slices, matmul_dtype),
        out_shape=jax.ShapeDtypeStruct((n_out, B), jnp.float32),
        grid=grid,
        in_specs=in_specs,
        out_specs=pl.BlockSpec((n_out, bt), lambda i: (0, i)),
        compiler_params=pltpu.CompilerParams(
            dimension_semantics=("parallel",),
            vmem_limit_bytes=vmem_limit,
        ),
    )(*args)

    return out_t.T                                            # (B, n_out) float32


def init_params(key, in_features, out_units, n_out):
    """U(-1/sqrt(fan_in), +1/sqrt(fan_in)) init, PyTorch nn.Linear layout."""
    in_units = [in_features] + out_units[:-1]
    dims = list(zip(in_units, out_units)) + [(out_units[-1], n_out)]
    names = [str(i) for i in range(len(out_units))] + ["_out"]
    params = {}
    keys = jax.random.split(key, 2 * len(dims))
    for j, ((fan_in, fan_out), name) in enumerate(zip(dims, names)):
        bound = 1.0 / (fan_in ** 0.5)
        params[f"w{name}"] = jax.random.uniform(
            keys[2 * j], (fan_out, fan_in), jnp.float32, -bound, bound)
        params[f"b{name}"] = jax.random.uniform(
            keys[2 * j + 1], (fan_out, 1), jnp.float32, -bound, bound)
    return params


def ann_reference(x, params):
    """Pure-JAX reference of the same forward pass (for a sanity check)."""
    n_layers = 0
    while f"w{n_layers}" in params:
        n_layers += 1
    h = x
    for i in range(n_layers):
        h = jnp.maximum(h @ params[f"w{i}"].T + params[f"b{i}"].T, 0.0)
    return jax.nn.sigmoid(h @ params["w_out"].T + params["b_out"].T)


if __name__ == "__main__":
    # Shapes consistent with ANN(in_features=32, out_units=[32, 16], n_out=1).
    # B=512 -> tile selection picks bt=256, grid=(2,) so both v7x TCs get work.
    B, in_features, out_units, n_out = 512, 32, [32, 16], 1

    key = jax.random.PRNGKey(0)
    k_x, k_p = jax.random.split(key)
    x = jax.random.normal(k_x, (B, in_features), jnp.float32)
    params = init_params(k_p, in_features, out_units, n_out)

    ref = ann_reference(x, params)

    # Exact-path check: f32 MXU operands.
    out_f32 = jax.block_until_ready(
        ann_forward(x, params, matmul_dtype=jnp.float32))
    assert out_f32.shape == (B, n_out)
    assert jnp.max(jnp.abs(out_f32 - ref)) < 1e-5, "f32 Pallas output mismatch"

    # Default fast path: bf16 MXU operands with f32 accumulation.
    out_bf16 = jax.block_until_ready(ann_forward(x, params))
    assert out_bf16.shape == (B, n_out)
    assert jnp.max(jnp.abs(out_bf16 - ref)) < 2e-2, "bf16 Pallas output mismatch"

    # Ragged batch (B not a multiple of 128) exercises the unpadded last block.
    x_r = x[:300]
    ref_r = ann_reference(x_r, params)
    out_r = jax.block_until_ready(
        ann_forward(x_r, params, matmul_dtype=jnp.float32))
    assert out_r.shape == (300, n_out)
    assert jnp.max(jnp.abs(out_r - ref_r)) < 1e-5, "ragged Pallas output mismatch"

    print("KERNEL_OK")
</pallas_src>

<mosaic_0001>
module attributes {stable_mosaic.version = 11 : i64} {
  func.func @kernel(%arg0: i32, %arg1: memref<256x32xf32, #tpu.memory_space<vmem>>, %arg2: memref<32x32xf32, #tpu.memory_space<vmem>>, %arg3: memref<16x32xf32, #tpu.memory_space<vmem>>, %arg4: memref<16x1xf32, #tpu.memory_space<vmem>>, %arg5: memref<56x1xf32, #tpu.memory_space<vmem>>, %arg6: memref<1x256xf32, #tpu.memory_space<vmem>>) attributes {dimension_semantics = [#tpu.dimension_semantics<parallel>], iteration_bounds = array<i64: 2>, scalar_prefetch = 0 : i64, scratch_operands = 0 : i64, tpu.core_type = #tpu.core_type<tc>, window_params = [{transform_indices = @transform_0, window_bounds = array<i64: 256, 32>}, {pipeline_mode = #tpu.pipeline_mode<synchronous>, transform_indices = @transform_1, window_bounds = array<i64: 32, 32>}, {pipeline_mode = #tpu.pipeline_mode<synchronous>, transform_indices = @transform_2, window_bounds = array<i64: 16, 32>}, {pipeline_mode = #tpu.pipeline_mode<synchronous>, transform_indices = @transform_3, window_bounds = array<i64: 16, 1>}, {pipeline_mode = #tpu.pipeline_mode<synchronous>, transform_indices = @transform_4, window_bounds = array<i64: 56, 1>}, {transform_indices = @transform_5, window_bounds = array<i64: 1, 256>}]} {
    %c0 = arith.constant 0 : index
    %c0_0 = arith.constant 0 : index
    %0 = vector.load %arg1[%c0, %c0_0] : memref<256x32xf32, #tpu.memory_space<vmem>>, vector<256x32xf32>
    %c0_1 = arith.constant 0 : index
    %c0_2 = arith.constant 0 : index
    %1 = vector.load %arg2[%c0_1, %c0_2] : memref<32x32xf32, #tpu.memory_space<vmem>>, vector<32x32xf32>
    %cst = arith.constant dense<0.000000e+00> : vector<32x256xf32>
    %2 = tpu.matmul %1, %0, %cst {dimension_numbers = #tpu.dot_dimension_numbers<[1], [1], [0], [0], [0, 0, 1, 0], [], []>} : vector<32x32xf32>, vector<256x32xf32>, vector<32x256xf32> -> vector<32x256xf32>
    %c0_3 = arith.constant 0 : index
    %c0_4 = arith.constant 0 : index
    %3 = vector.load %arg5[%c0_3, %c0_4] : memref<56x1xf32, #tpu.memory_space<vmem>>, vector<32x1xf32>
    %4 = vector.broadcast %3 : vector<32x1xf32> to vector<32x256xf32>
    %5 = arith.addf %2, %4 : vector<32x256xf32>
    %cst_5 = arith.constant 0.000000e+00 : f32
    %6 = vector.broadcast %cst_5 : f32 to vector<32x256xf32>
    %7 = arith.maximumf %5, %6 : vector<32x256xf32>
    %c0_6 = arith.constant 0 : index
    %c0_7 = arith.constant 0 : index
    %8 = vector.load %arg3[%c0_6, %c0_7] : memref<16x32xf32, #tpu.memory_space<vmem>>, vector<16x32xf32>
    %cst_8 = arith.constant dense<0.000000e+00> : vector<16x256xf32>
    %9 = tpu.matmul %8, %7, %cst_8 {dimension_numbers = #tpu.dot_dimension_numbers<[1], [0], [0], [1], [0, 0, 1, 1], [], []>} : vector<16x32xf32>, vector<32x256xf32>, vector<16x256xf32> -> vector<16x256xf32>
    %c32 = arith.constant 32 : index
    %c0_9 = arith.constant 0 : index
    %10 = vector.load %arg5[%c32, %c0_9] : memref<56x1xf32, #tpu.memory_space<vmem>>, vector<16x1xf32>
    %11 = vector.broadcast %10 : vector<16x1xf32> to vector<16x256xf32>
    %12 = arith.addf %9, %11 : vector<16x256xf32>
    %cst_10 = arith.constant 0.000000e+00 : f32
    %13 = vector.broadcast %cst_10 : f32 to vector<16x256xf32>
    %14 = arith.maximumf %12, %13 : vector<16x256xf32>
    %c48 = arith.constant 48 : index
    %c0_11 = arith.constant 0 : index
    %15 = vector.load %arg5[%c48, %c0_11] : memref<56x1xf32, #tpu.memory_space<vmem>>, vector<1x1xf32>
    %c0_12 = arith.constant 0 : index
    %c0_13 = arith.constant 0 : index
    %16 = vector.load %arg4[%c0_12, %c0_13] : memref<16x1xf32, #tpu.memory_space<vmem>>, vector<16x1xf32>
    %17 = vector.broadcast %16 : vector<16x1xf32> to vector<16x256xf32>
    %18 = arith.mulf %14, %17 : vector<16x256xf32>
    %cst_14 = arith.constant dense<0.000000e+00> : vector<256xf32>
    %19 = vector.multi_reduction <add>, %18, %cst_14 [0] : vector<16x256xf32> to vector<256xf32>
    %20 = vector.shape_cast %19 : vector<256xf32> to vector<1x256xf32>
    %21 = vector.broadcast %15 : vector<1x1xf32> to vector<1x256xf32>
    %22 = arith.addf %20, %21 : vector<1x256xf32>
    %23 = arith.negf %22 : vector<1x256xf32>
    %24 = math.exp %23 : vector<1x256xf32>
    %cst_15 = arith.constant 1.000000e+00 : f32
    %25 = vector.broadcast %cst_15 : f32 to vector<1x256xf32>
    %26 = arith.addf %25, %24 : vector<1x256xf32>
    %27 = arith.divf %25, %26 : vector<1x256xf32>
    %c0_16 = arith.constant 0 : index
    %c0_17 = arith.constant 0 : index
    %28 = vector.load %arg6[%c0_16, %c0_17] : memref<1x256xf32, #tpu.memory_space<vmem>>, vector<1x256xf32>
    tpu.vector_store %arg6[%c0_16, %c0_17], %27 {strides = array<i32>} : memref<1x256xf32, #tpu.memory_space<vmem>>, vector<1x256xf32>,
    return
  }
  func.func @transform_0(%arg0: i32) -> (i32, i32) {
    %c0_i32 = arith.constant 0 : i32
    %c0_i32_0 = arith.constant 0 : i32
    return %arg0, %c0_i32 : i32, i32
  }
  func.func @transform_1(%arg0: i32) -> (i32, i32) {
    %c0_i32 = arith.constant 0 : i32
    %c0_i32_0 = arith.constant 0 : i32
    %c0_i32_1 = arith.constant 0 : i32
    return %c0_i32, %c0_i32_0 : i32, i32
  }
  func.func @transform_2(%arg0: i32) -> (i32, i32) {
    %c0_i32 = arith.constant 0 : i32
    %c0_i32_0 = arith.constant 0 : i32
    %c0_i32_1 = arith.constant 0 : i32
    return %c0_i32, %c0_i32_0 : i32, i32
  }
  func.func @transform_3(%arg0: i32) -> (i32, i32) {
    %c0_i32 = arith.constant 0 : i32
    %c0_i32_0 = arith.constant 0 : i32
    %c0_i32_1 = arith.constant 0 : i32
    return %c0_i32, %c0_i32_0 : i32, i32
  }
  func.func @transform_4(%arg0: i32) -> (i32, i32) {
    %c0_i32 = arith.constant 0 : i32
    %c0_i32_0 = arith.constant 0 : i32
    %c0_i32_1 = arith.constant 0 : i32
    return %c0_i32, %c0_i32_0 : i32, i32
  }
  func.func @transform_5(%arg0: i32) -> (i32, i32) {
    %c0_i32 = arith.constant 0 : i32
    %c0_i32_0 = arith.constant 0 : i32
    return %c0_i32, %arg0 : i32, i32
  }
}

</mosaic_0001>

<llo_original>
// kernel: tpu_custom_call.1
$region0: #{tpu_custom_call.1}
  #allocation0 [shape = 'u32[]', space=smem, size = 0x4, offset = 0x4, fixed_abs, tag = 'smem constant byte address 0x4 - core index']
  #allocation1 [shape = 'u32[144,128]{1,0:T(1,128)}', space=vmem, size = 0x12000, scoped, tag = 'internal scratch']
  %s0 = inlined_call_operand.vmem [shape: f32[512,32], index: 0, kind: input, shape index: {}]
  %s1 = inlined_call_operand.vmem [shape: f32[32,32], index: 1, kind: input, shape index: {}]
  %s2 = inlined_call_operand.vmem [shape: f32[16,32], index: 2, kind: input, shape index: {}]
  %s3 = inlined_call_operand.vmem [shape: f32[16,1], index: 3, kind: input, shape index: {}]
  %s4 = inlined_call_operand.vmem [shape: f32[56,1], index: 4, kind: input, shape index: {}]
  %s5 = inlined_call_operand.hbm [shape: f32[1,512], index: 5, kind: output, shape index: {}]
  %s6 = sld [smem:[#allocation0]]
  $region53: #{tpu_custom_call.1} parent=0
    _
  %s8 = ssub.s32 1, %s6
  %s9 = scalar_select 0, %s8, %s6
  $region1: #{tpu_custom_call.1} parent=0
    #allocation2 [shape = 'u8[2048]{0}', space=vmem, size = 0x800, scoped, tag = 'output window, operand 0']
    #allocation3 [shape = 's32[2]{0}', space=sflag, size = 0x8, scoped, tag = 'scoped memory for tpu_custom_call.1']
    %10 = vsyncpa [#allocation3], 0
    %s11 = scalar_lea.sflag [#allocation3], 1
    %12 = vsyncpa %s11, 0
    loop: start=0, step=1, limit=4
    $region2: #{tpu_custom_call.1} parent=1 // loop_pre_header
      _
    $region3: #{tpu_custom_call.1} parent=1 // loop_header
      %s14 = sphi 0, %s18
      %p15 = scmp.ge.s32.totalorder %s14, 4
      %s24 = sphi 0, %s26
      %s27 = sphi 0, %s24
      %s28 = sphi 0, %s27
      %s44 = sphi 0, %s28
      %s48 = sphi 0, %s48
      %s50 = sphi 0, %s48
      %s51 = sphi 0, %s50
      %s65 = sphi 0, %s51
      %s69 = sphi 0, %s69
      %s71 = sphi 0, %s69
      %s72 = sphi 0, %s71
      %s86 = sphi 0, %s72
      %s90 = sphi 0, %s90
      %s92 = sphi 0, %s90
      %s93 = sphi 0, %s92
      %s107 = sphi 0, %s93
      %s111 = sphi 0, %s111
      %s113 = sphi 0, %s111
      %s114 = sphi 0, %s113
      %s128 = sphi 0, %s114
      %s134 = sphi 0, %s136
      %s137 = sphi 0, %s134
      %s138 = sphi 0, %s137
      %s154 = sphi 0, %s138
    $region4: #{tpu_custom_call.1} parent=1 // loop_header_branch
      %17 = sbr.rel (%p15) target = $region8
    $region5: #{tpu_custom_call.1} parent=1 // loop_body
      %s19 = ssub.s32 %s14, 1
      %s20 = ssub.s32 %s14, 2
      %s21 = sadd.s32 %s14, 1
      %s22 = ssub.s32 %s14, %s21
      %p23 = scmp.eq.s32.totalorder %s22, 0
      %s25 = sadd.s32 %s24, 1
      %s26 = scalar_select %p23, %s24, %s25
      %p29 = pneg %p23
      %p30 = scmp.eq.s32.totalorder %s14, 1
      %p31 = por %p29, %p30
      %p32 = scmp.ne.s32.totalorder %s24, %s27
      %p33 = scmp.eq.s32.totalorder %s14, 0
      %p34 = por %p32, %p33
      %p35 = scmp.ne.s32.totalorder %s24, %s27
      %p36 = scmp.eq.s32.totalorder %s19, 1
      %p37 = por %p35, %p36
      %p38 = scmp.ne.s32.totalorder %s27, %s28
      %p39 = scmp.eq.s32.totalorder %s19, 0
      %p40 = por %p38, %p39
      %p41 = scmp.ne.s32.totalorder %s27, %s28
      %p42 = scmp.eq.s32.totalorder %s20, 1
      %p43 = por %p41, %p42
      %p45 = scmp.ne.s32.totalorder %s28, %s44
      %p46 = scmp.eq.s32.totalorder %s20, 0
      %p47 = por %p45, %p46
      %s49 = sadd.s32 %s48, 1
      %p52 = scmp.eq.s32.totalorder %s14, 1
      %p53 = scmp.ne.s32.totalorder %s48, %s50
      %p54 = scmp.eq.s32.totalorder %s14, 0
      %p55 = por %p53, %p54
      %p56 = scmp.ne.s32.totalorder %s48, %s50
      %p57 = scmp.eq.s32.totalorder %s19, 1
      %p58 = por %p56, %p57
      %p59 = scmp.ne.s32.totalorder %s50, %s51
      %p60 = scmp.eq.s32.totalorder %s19, 0
      %p61 = por %p59, %p60
      %p62 = scmp.ne.s32.totalorder %s50, %s51
      %p63 = scmp.eq.s32.totalorder %s20, 1
      %p64 = por %p62, %p63
      %p66 = scmp.ne.s32.totalorder %s51, %s65
      %p67 = scmp.eq.s32.totalorder %s20, 0
      %p68 = por %p66, %p67
      %s70 = sadd.s32 %s69, 1
      %p73 = scmp.eq.s32.totalorder %s14, 1
      %p74 = scmp.ne.s32.totalorder %s69, %s71
      %p75 = scmp.eq.s32.totalorder %s14, 0
      %p76 = por %p74, %p75
      %p77 = scmp.ne.s32.totalorder %s69, %s71
      %p78 = scmp.eq.s32.totalorder %s19, 1
      %p79 = por %p77, %p78
      %p80 = scmp.ne.s32.totalorder %s71, %s72
      %p81 = scmp.eq.s32.totalorder %s19, 0
      %p82 = por %p80, %p81
      %p83 = scmp.ne.s32.totalorder %s71, %s72
      %p84 = scmp.eq.s32.totalorder %s20, 1
      %p85 = por %p83, %p84
      %p87 = scmp.ne.s32.totalorder %s72, %s86
      %p88 = scmp.eq.s32.totalorder %s20, 0
      %p89 = por %p87, %p88
      %s91 = sadd.s32 %s90, 1
      %p94 = scmp.eq.s32.totalorder %s14, 1
      %p95 = scmp.ne.s32.totalorder %s90, %s92
      %p96 = scmp.eq.s32.totalorder %s14, 0
      %p97 = por %p95, %p96
      %p98 = scmp.ne.s32.totalorder %s90, %s92
      %p99 = scmp.eq.s32.totalorder %s19, 1
      %p100 = por %p98, %p99
      %p101 = scmp.ne.s32.totalorder %s92, %s93
      %p102 = scmp.eq.s32.totalorder %s19, 0
      %p103 = por %p101, %p102
      %p104 = scmp.ne.s32.totalorder %s92, %s93
      %p105 = scmp.eq.s32.totalorder %s20, 1
      %p106 = por %p104, %p105
      %p108 = scmp.ne.s32.totalorder %s93, %s107
      %p109 = scmp.eq.s32.totalorder %s20, 0
      %p110 = por %p108, %p109
      %s112 = sadd.s32 %s111, 1
      %p115 = scmp.eq.s32.totalorder %s14, 1
      %p116 = scmp.ne.s32.totalorder %s111, %s113
      %p117 = scmp.eq.s32.totalorder %s14, 0
      %p118 = por %p116, %p117
      %p119 = scmp.ne.s32.totalorder %s111, %s113
      %p120 = scmp.eq.s32.totalorder %s19, 1
      %p121 = por %p119, %p120
      %p122 = scmp.ne.s32.totalorder %s113, %s114
      %p123 = scmp.eq.s32.totalorder %s19, 0
      %p124 = por %p122, %p123
      %p125 = scmp.ne.s32.totalorder %s113, %s114
      %p126 = scmp.eq.s32.totalorder %s20, 1
      %p127 = por %p125, %p126
      %p129 = scmp.ne.s32.totalorder %s114, %s128
      %p130 = scmp.eq.s32.totalorder %s20, 0
      %p131 = por %p129, %p130
      %s132 = ssub.s32 %s14, %s21
      %p133 = scmp.eq.s32.totalorder %s132, 0
      %s135 = sadd.s32 %s134, 1
      %s136 = scalar_select %p133, %s134, %s135
      %p139 = pneg %p133
      %p140 = scmp.eq.s32.totalorder %s14, 1
      %p141 = por %p139, %p140
      %p142 = scmp.ne.s32.totalorder %s134, %s137
      %p143 = scmp.eq.s32.totalorder %s14, 0
      %p144 = por %p142, %p143
      %p145 = scmp.ne.s32.totalorder %s134, %s137
      %p146 = scmp.eq.s32.totalorder %s19, 1
      %p147 = por %p145, %p146
      %p148 = scmp.ne.s32.totalorder %s137, %s138
      %p149 = scmp.eq.s32.totalorder %s19, 0
      %p150 = por %p148, %p149
      %p151 = scmp.ne.s32.totalorder %s137, %s138
      %p152 = scmp.eq.s32.totalorder %s20, 1
      %p153 = por %p151, %p152
      %p155 = scmp.ne.s32.totalorder %s138, %s154
      %p156 = scmp.eq.s32.totalorder %s20, 0
      %p157 = por %p155, %p156
      %p158 = scmp.le.s32.totalorder 1, %s14
      %p159 = scmp.lt.s32.totalorder %s14, 3
      %p160 = pnand %p158, %p159
      %p161 = pneg %p160
      // Predicated region
      $region9: #{tpu_custom_call.1} parent=5 // pred_check
        _
      $region10: #{tpu_custom_call.1} parent=5 // pred_check_branch
        %163 = sbr.rel (%p160) target = $region12
      $region11: #{tpu_custom_call.1} parent=5 // pred_region
        %s164 = ssub.s32 %s14, 1
        // Predicated region
        $region13: #{tpu_custom_call.1} parent=11 // pred_check
          %p165 = pneg %p61
        $region14: #{tpu_custom_call.1} parent=11 // pred_check_branch
          %167 = sbr.rel (%p165) target = $region16
        $region15: #{tpu_custom_call.1} parent=11 // pred_region
          _
        $region16: #{tpu_custom_call.1} parent=11 // pred_fallthru
          _
        // Predicated region
        $region17: #{tpu_custom_call.1} parent=11 // pred_check
          %p168 = pneg %p82
        $region18: #{tpu_custom_call.1} parent=11 // pred_check_branch
          %170 = sbr.rel (%p168) target = $region20
        $region19: #{tpu_custom_call.1} parent=11 // pred_region
          _
        $region20: #{tpu_custom_call.1} parent=11 // pred_fallthru
          _
        // Predicated region
        $region21: #{tpu_custom_call.1} parent=11 // pred_check
          %p171 = pneg %p103
        $region22: #{tpu_custom_call.1} parent=11 // pred_check_branch
          %173 = sbr.rel (%p171) target = $region24
        $region23: #{tpu_custom_call.1} parent=11 // pred_region
          _
        $region24: #{tpu_custom_call.1} parent=11 // pred_fallthru
          _
        // Predicated region
        $region25: #{tpu_custom_call.1} parent=11 // pred_check
          %p174 = pneg %p124
        $region26: #{tpu_custom_call.1} parent=11 // pred_check_branch
          %176 = sbr.rel (%p174) target = $region28
        $region27: #{tpu_custom_call.1} parent=11 // pred_region
          _
        $region28: #{tpu_custom_call.1} parent=11 // pred_fallthru
          _
      $region12: #{tpu_custom_call.1} parent=5 // pred_fallthru
        _
      %p177 = scmp.lt.s32.totalorder %s14, 2
      // Predicated region
      $region29: #{tpu_custom_call.1} parent=5 // pred_check
        %p178 = pneg %p177
      $region30: #{tpu_custom_call.1} parent=5 // pred_check_branch
        %180 = sbr.rel (%p178) target = $region32
      $region31: #{tpu_custom_call.1} parent=5 // pred_region
        // Predicated region
        $region33: #{tpu_custom_call.1} parent=31 // pred_check
          %p181 = pneg %p34
        $region34: #{tpu_custom_call.1} parent=31 // pred_check_branch
          %183 = sbr.rel (%p181) target = $region36
        $region35: #{tpu_custom_call.1} parent=31 // pred_region
          %s184 = smul.u32 32, %s14
          %p185 = scmp.lt.s32.totalorder %s184, 63
          %s186 = scalar_select %p185, %s184, 63
          %s187 = smul.addr %s186, 8
          %s188 = scalar_lea.vmem %s0, %s187
          %s189 = smul.u32 32, %s14
        $region36: #{tpu_custom_call.1} parent=31 // pred_fallthru
          _
      $region32: #{tpu_custom_call.1} parent=5 // pred_fallthru
        _
      %p190 = scmp.le.s32.totalorder 1, %s14
      %p191 = scmp.lt.s32.totalorder %s14, 3
      %p192 = pnand %p190, %p191
      %p193 = pneg %p192
      // Predicated region
      $region37: #{tpu_custom_call.1} parent=5 // pred_check
        _
      $region38: #{tpu_custom_call.1} parent=5 // pred_check_branch
        %195 = sbr.rel (%p192) target = $region40
      $region39: #{tpu_custom_call.1} parent=5 // pred_region
        %s196 = ssub.s32 %s14, 1
        %s197 = smul.u32 32, %s19
        %p198 = scmp.lt.s32.totalorder %s197, 63
        %s199 = scalar_select %p198, %s197, 63
        %s200 = smul.addr %s199, 8
        %s201 = scalar_lea.vmem %s0, %s200
        %p202 = pneg %p40
        %p203 = pneg %p37
        %p204 = pneg %p61
        %p205 = pneg %p58
        %p206 = pneg %p82
        %p207 = pneg %p79
        %p208 = pneg %p103
        %p209 = pneg %p100
        %p210 = pneg %p124
        %p211 = pneg %p121
        %p212 = pneg %p150
        %p213 = pneg %p147
        %s214 = sand.u32 %s137, 1
        %s215 = scalar_lea.sflag [#allocation3], %s214
        %s216 = sand.u32 %s137, 1
        %s217 = smul.addr %s216, 2
        %s218 = scalar_lea.vmem [#allocation2], %s217
        %s219 = smul.u32 32, %s19
        %p220 = scmp.lt.s32.totalorder %s219, 63
        %s221 = scalar_select %p220, %s219, 63
        %s222 = smul.addr %s221, 8
        %s223 = scalar_lea.vmem %s0, %s222
        %s224 = smul.u32 32, %s19
        %s225 = smul.u32 2, %s19
        %v226 = vld [vmem:[%s223] sm:$0xff]
        %v227 = vld [vmem:[%s223 + $0x8] sm:$0xff]
        %v228 = vld [vmem:[%s223 + $0x10] sm:$0xff]
        %v229 = vld [vmem:[%s223 + $0x18] sm:$0xff]
        %v230 = vld [vmem:[%s223 + $0x20] sm:$0xff]
        %v231 = vld [vmem:[%s223 + $0x28] sm:$0xff]
        %v232 = vld [vmem:[%s223 + $0x30] sm:$0xff]
        %v233 = vld [vmem:[%s223 + $0x38] sm:$0xff]
        %v234 = vld [vmem:[%s223 + $0x40] sm:$0xff]
        %v235 = vld [vmem:[%s223 + $0x48] sm:$0xff]
        %v236 = vld [vmem:[%s223 + $0x50] sm:$0xff]
        %v237 = vld [vmem:[%s223 + $0x58] sm:$0xff]
        %v238 = vld [vmem:[%s223 + $0x60] sm:$0xff]
        %v239 = vld [vmem:[%s223 + $0x68] sm:$0xff]
        %v240 = vld [vmem:[%s223 + $0x70] sm:$0xff]
        %v241 = vld [vmem:[%s223 + $0x78] sm:$0xff]
        %v242 = vld [vmem:[%s223 + $0x80] sm:$0xff]
        %v243 = vld [vmem:[%s223 + $0x88] sm:$0xff]
        %v244 = vld [vmem:[%s223 + $0x90] sm:$0xff]
        %v245 = vld [vmem:[%s223 + $0x98] sm:$0xff]
        %v246 = vld [vmem:[%s223 + $0xa0] sm:$0xff]
        %v247 = vld [vmem:[%s223 + $0xa8] sm:$0xff]
        %v248 = vld [vmem:[%s223 + $0xb0] sm:$0xff]
        %v249 = vld [vmem:[%s223 + $0xb8] sm:$0xff]
        %v250 = vld [vmem:[%s223 + $0xc0] sm:$0xff]
        %v251 = vld [vmem:[%s223 + $0xc8] sm:$0xff]
        %v252 = vld [vmem:[%s223 + $0xd0] sm:$0xff]
        %v253 = vld [vmem:[%s223 + $0xd8] sm:$0xff]
        %v254 = vld [vmem:[%s223 + $0xe0] sm:$0xff]
        %v255 = vld [vmem:[%s223 + $0xe8] sm:$0xff]
        %v256 = vld [vmem:[%s223 + $0xf0] sm:$0xff]
        %v257 = vld [vmem:[%s223 + $0xf8] sm:$0xff]
        %v258 = vld [vmem:[%s1] sm:$0xff]
        %v259 = vld [vmem:[%s1 + $0x8] sm:$0xff]
        %v260 = vld [vmem:[%s1 + $0x10] sm:$0xff]
        %v261 = vld [vmem:[%s1 + $0x18] sm:$0xff]
        %v262 = vld [vmem:[%s4] sm:$0xff]
        %v263 = vld [vmem:[%s4 + $0x8] sm:$0xff]
        %v264 = vld [vmem:[%s4 + $0x10] sm:$0xff]
        %v265 = vld [vmem:[%s4 + $0x18] sm:$0xff]
        %267 = vset.pattern.permute.xlu0 0
        %268 = vperm.xlu0 %267, %v262
        %v269 = vpop.permute.xlu0 %268
        %272 = vset.pattern.permute.xlu0 0
        %273 = vperm.xlu0 %272, %v263
        %v274 = vpop.permute.xlu0 %273
        %277 = vset.pattern.permute.xlu0 0
        %278 = vperm.xlu0 %277, %v264
        %v279 = vpop.permute.xlu0 %278
        %282 = vset.pattern.permute.xlu0 0
        %283 = vperm.xlu0 %282, %v265
        %v284 = vpop.permute.xlu0 %283
        %vm286 = vcmask 261120
        %v288 = vsel %vm286, %v258, 0
        %v291 = vsel %vm286, %v259, 0
        %v294 = vsel %vm286, %v260, 0
        %v297 = vsel %vm286, %v261, 0
        %v300 = vsel %vm286, %v226, 0
        %v303 = vsel %vm286, %v227, 0
        %v306 = vsel %vm286, %v228, 0
        %v309 = vsel %vm286, %v229, 0
        %v312 = vsel %vm286, %v230, 0
        %v315 = vsel %vm286, %v231, 0
        %v318 = vsel %vm286, %v232, 0
        %v321 = vsel %vm286, %v233, 0
        %v324 = vsel %vm286, %v234, 0
        %v327 = vsel %vm286, %v235, 0
        %v330 = vsel %vm286, %v236, 0
        %v333 = vsel %vm286, %v237, 0
        %v336 = vsel %vm286, %v238, 0
        %v339 = vsel %vm286, %v239, 0
        %v342 = vsel %vm286, %v240, 0
        %v345 = vsel %vm286, %v241, 0
        %v348 = vsel %vm286, %v242, 0
        %v351 = vsel %vm286, %v243, 0
        %v354 = vsel %vm286, %v244, 0
        %v357 = vsel %vm286, %v245, 0
        %v360 = vsel %vm286, %v246, 0
        %v363 = vsel %vm286, %v247, 0
        %v366 = vsel %vm286, %v248, 0
        %v369 = vsel %vm286, %v249, 0
        %v372 = vsel %vm286, %v250, 0
        %v375 = vsel %vm286, %v251, 0
        %v378 = vsel %vm286, %v252, 0
        %v381 = vsel %vm286, %v253, 0
        %v384 = vsel %vm286, %v254, 0
        %v387 = vsel %vm286, %v255, 0
        %v390 = vsel %vm286, %v256, 0
        %v393 = vsel %vm286, %v257, 0
        %395 = vmatprep.subr.mxu0 0.0
        %396 = vmatpush1.xpose.msra.mxu0 %v345
        %397 = vmatprep.subr.mxu0 0.0
        %398 = vmatpush1.xpose.msra.mxu0 %v342
        %399 = vmatprep.subr.mxu0 0.0
        %400 = vmatpush1.xpose.msra.mxu0 %v339
        %401 = vmatprep.subr.mxu0 0.0
        %402 = vmatpush1.xpose.msra.mxu0 %v336
        %403 = vmatprep.subr.mxu0 0.0
        %404 = vmatpush1.xpose.msra.mxu0 %v333
        %405 = vmatprep.subr.mxu0 0.0
        %406 = vmatpush1.xpose.msra.mxu0 %v330
        %407 = vmatprep.subr.mxu0 0.0
        %408 = vmatpush1.xpose.msra.mxu0 %v327
        %409 = vmatprep.subr.mxu0 0.0
        %410 = vmatpush1.xpose.msra.mxu0 %v324
        %411 = vmatprep.subr.mxu0 0.0
        %412 = vmatpush1.xpose.msra.mxu0 %v321
        %413 = vmatprep.subr.mxu0 0.0
        %414 = vmatpush1.xpose.msra.mxu0 %v318
        %415 = vmatprep.subr.mxu0 0.0
        %416 = vmatpush1.xpose.msra.mxu0 %v315
        %417 = vmatprep.subr.mxu0 0.0
        %418 = vmatpush1.xpose.msra.mxu0 %v312
        %419 = vmatprep.subr.mxu0 0.0
        %420 = vmatpush1.xpose.msra.mxu0 %v309
        %421 = vmatprep.subr.mxu0 0.0
        %422 = vmatpush1.xpose.msra.mxu0 %v306
        %423 = vmatprep.subr.mxu0 0.0
        %424 = vmatpush1.xpose.msra.mxu0 %v303
        %425 = vmatprep.subr.mxu0 0.0
        %426 = vmatpush1.xpose.msra.mxu0 %v300
        %427 = vmatprep.subr.mxu0 0.0
        %428 = vmatpush2.xpose.msra.mxu0 %v393
        %429 = vmatprep.subr.mxu0 0.0
        %430 = vmatpush2.xpose.msra.mxu0 %v390
        %431 = vmatprep.subr.mxu0 0.0
        %432 = vmatpush2.xpose.msra.mxu0 %v387
        %433 = vmatprep.subr.mxu0 0.0
        %434 = vmatpush2.xpose.msra.mxu0 %v384
        %435 = vmatprep.subr.mxu0 0.0
        %436 = vmatpush2.xpose.msra.mxu0 %v381
        %437 = vmatprep.subr.mxu0 0.0
        %438 = vmatpush2.xpose.msra.mxu0 %v378
        %439 = vmatprep.subr.mxu0 0.0
        %440 = vmatpush2.xpose.msra.mxu0 %v375
        %441 = vmatprep.subr.mxu0 0.0
        %442 = vmatpush2.xpose.msra.mxu0 %v372
        %443 = vmatprep.subr.mxu0 0.0
        %444 = vmatpush2.xpose.msra.mxu0 %v369
        %445 = vmatprep.subr.mxu0 0.0
        %446 = vmatpush2.xpose.msra.mxu0 %v366
        %447 = vmatprep.subr.mxu0 0.0
        %448 = vmatpush2.xpose.msra.mxu0 %v363
        %449 = vmatprep.subr.mxu0 0.0
        %450 = vmatpush2.xpose.msra.mxu0 %v360
        %451 = vmatprep.subr.mxu0 0.0
        %452 = vmatpush2.xpose.msra.mxu0 %v357
        %453 = vmatprep.subr.mxu0 0.0
        %454 = vmatpush2.xpose.msra.mxu0 %v354
        %455 = vmatprep.subr.mxu0 0.0
        %456 = vmatpush2.xpose.msra.mxu0 %v351
        %457 = vmatprep.subr.mxu0 0.0
        %458 = vmatpush2.xpose.msra.mxu0 %v348
        %459 = vmatprep.mubr.f32.mxu0 0.0
        %460 = vmatmul.mubr.f32.gmra.mxu0 %v288
        %v461 = vpop.f32.mrf.mxu0
        %v462 = vadd.f32 %v269, %v461
        %v463 = vpop.f32.mrf.mxu0
        %v464 = vadd.f32 %v269, %v463
        %465 = vmatprep.mubr.f32.mxu0 0.0
        %466 = vmatmul.mubr.f32.gmra.mxu0 %v291
        %v467 = vpop.f32.mrf.mxu0
        %v468 = vadd.f32 %v274, %v467
        %v469 = vpop.f32.mrf.mxu0
        %v470 = vadd.f32 %v274, %v469
        %471 = vmatprep.mubr.f32.mxu0 0.0
        %472 = vmatmul.mubr.f32.gmra.mxu0 %v294
        %v473 = vpop.f32.mrf.mxu0
        %v474 = vadd.f32 %v279, %v473
        %v475 = vpop.f32.mrf.mxu0
        %v476 = vadd.f32 %v279, %v475
        %477 = vmatprep.mubr.f32.mxu0 0.0
        %478 = vmatmul.mubr.f32.gmra.mxu0 %v297
        %v479 = vpop.f32.mrf.mxu0
        %v480 = vadd.f32 %v284, %v479
        %v481 = vpop.f32.mrf.mxu0
        %v482 = vadd.f32 %v284, %v481
        %483 = vdwg.mxu0
        %v484 = vmax.f32 %v462, 0.0
        %v485 = vmax.f32 %v464, 0.0
        %v486 = vmax.f32 %v468, 0.0
        %v487 = vmax.f32 %v470, 0.0
        %v488 = vmax.f32 %v474, 0.0
        %v489 = vmax.f32 %v476, 0.0
        %v490 = vmax.f32 %v480, 0.0
        %v491 = vmax.f32 %v482, 0.0
        %v492 = vld [vmem:[%s2] sm:$0xff]
        %v493 = vld [vmem:[%s2 + $0x8] sm:$0xff]
        %v494 = vld [vmem:[%s4 + $0x20] sm:$0xff]
        %v495 = vld [vmem:[%s4 + $0x28] sm:$0xff]
        %497 = vset.pattern.permute.xlu0 0
        %498 = vperm.xlu0 %497, %v494
        %v499 = vpop.permute.xlu0 %498
        %502 = vset.pattern.permute.xlu0 0
        %503 = vperm.xlu0 %502, %v495
        %v504 = vpop.permute.xlu0 %503
        %v507 = vsel %vm286, %v492, 0
        %v510 = vsel %vm286, %v493, 0
        %512 = vmatprep.subr.mxu0 0.0
        %513 = vmatpush1.msra.mxu0 0.0
        %514 = vmatprep.subr.mxu0 0.0
        %515 = vmatpush1.msra.mxu0 0.0
        %516 = vmatprep.subr.mxu0 0.0
        %517 = vmatpush1.msra.mxu0 0.0
        %518 = vmatprep.subr.mxu0 0.0
        %519 = vmatpush1.msra.mxu0 0.0
        %520 = vmatprep.subr.mxu0 0.0
        %521 = vmatpush1.msra.mxu0 0.0
        %522 = vmatprep.subr.mxu0 0.0
        %523 = vmatpush1.msra.mxu0 0.0
        %524 = vmatprep.subr.mxu0 0.0
        %525 = vmatpush1.msra.mxu0 0.0
        %526 = vmatprep.subr.mxu0 0.0
        %527 = vmatpush1.msra.mxu0 0.0
        %528 = vmatprep.subr.mxu0 0.0
        %529 = vmatpush1.msra.mxu0 0.0
        %530 = vmatprep.subr.mxu0 0.0
        %531 = vmatpush1.msra.mxu0 0.0
        %532 = vmatprep.subr.mxu0 0.0
        %533 = vmatpush1.msra.mxu0 0.0
        %534 = vmatprep.subr.mxu0 0.0
        %535 = vmatpush1.msra.mxu0 0.0
        %536 = vmatprep.subr.mxu0 %v491
        %537 = vmatpush1.msra.mxu0 %v490
        %538 = vmatprep.subr.mxu0 %v489
        %539 = vmatpush1.msra.mxu0 %v488
        %540 = vmatprep.subr.mxu0 %v487
        %541 = vmatpush1.msra.mxu0 %v486
        %542 = vmatprep.subr.mxu0 %v485
        %543 = vmatpush1.msra.mxu0 %v484
        %544 = vmatprep.subr.mxu0 0.0
        %545 = vmatpush2.msra.mxu0 0.0
        %546 = vmatprep.subr.mxu0 0.0
        %547 = vmatpush2.msra.mxu0 0.0
        %548 = vmatprep.subr.mxu0 0.0
        %549 = vmatpush2.msra.mxu0 0.0
        %550 = vmatprep.subr.mxu0 0.0
        %551 = vmatpush2.msra.mxu0 0.0
        %552 = vmatprep.subr.mxu0 0.0
        %553 = vmatpush2.msra.mxu0 0.0
        %554 = vmatprep.subr.mxu0 0.0
        %555 = vmatpush2.msra.mxu0 0.0
        %556 = vmatprep.subr.mxu0 0.0
        %557 = vmatpush2.msra.mxu0 0.0
        %558 = vmatprep.subr.mxu0 0.0
        %559 = vmatpush2.msra.mxu0 0.0
        %560 = vmatprep.subr.mxu0 0.0
        %561 = vmatpush2.msra.mxu0 0.0
        %562 = vmatprep.subr.mxu0 0.0
        %563 = vmatpush2.msra.mxu0 0.0
        %564 = vmatprep.subr.mxu0 0.0
        %565 = vmatpush2.msra.mxu0 0.0
        %566 = vmatprep.subr.mxu0 0.0
        %567 = vmatpush2.msra.mxu0 0.0
        %568 = vmatprep.subr.mxu0 0.0
        %569 = vmatpush2.msra.mxu0 0.0
        %570 = vmatprep.subr.mxu0 0.0
        %571 = vmatpush2.msra.mxu0 0.0
        %572 = vmatprep.subr.mxu0 0.0
        %573 = vmatpush2.msra.mxu0 0.0
        %574 = vmatprep.subr.mxu0 0.0
        %575 = vmatpush2.msra.mxu0 0.0
        %576 = vmatprep.mubr.f32.mxu0 0.0
        %577 = vmatmul.mubr.f32.gmra.mxu0 %v507
        %v578 = vpop.f32.mrf.mxu0
        %v579 = vadd.f32 %v499, %v578
        %v580 = vpop.f32.mrf.mxu0
        %v581 = vadd.f32 %v499, %v580
        %582 = vmatprep.mubr.f32.mxu0 0.0
        %583 = vmatmul.mubr.f32.gmra.mxu0 %v510
        %v584 = vpop.f32.mrf.mxu0
        %v585 = vadd.f32 %v504, %v584
        %v586 = vpop.f32.mrf.mxu0
        %v587 = vadd.f32 %v504, %v586
        %588 = vdwg.mxu0
        %v589 = vmax.f32 %v579, 0.0
        %v590 = vmax.f32 %v581, 0.0
        %v591 = vmax.f32 %v585, 0.0
        %v592 = vmax.f32 %v587, 0.0
        %v593 = vld [vmem:[%s4 + $0x30] sm:$0x1]
        %v594 = vld [vmem:[%s3] sm:$0xff]
        %v595 = vld [vmem:[%s3 + $0x8] sm:$0xff]
        %597 = vset.pattern.permute.xlu0 0
        %598 = vperm.xlu0 %597, %v594
        %v599 = vpop.permute.xlu0 %598
        %602 = vset.pattern.permute.xlu0 0
        %603 = vperm.xlu0 %602, %v595
        %v604 = vpop.permute.xlu0 %603
        %v606 = vmul.f32 %v589, %v599
        %v607 = vmul.f32 %v590, %v599
        %v608 = vmul.f32 %v591, %v604
        %v609 = vmul.f32 %v592, %v604
        %v610 = vadd.f32 %v606, %v608
        %v611 = vrot.slane %v610, 4
        %v612 = vadd.f32 %v610, %v611
        %v613 = vrot.slane %v612, 2
        %v614 = vadd.f32 %v612, %v613
        %v615 = vrot.slane %v614, 1
        %v616 = vadd.f32 %v614, %v615
        %v617 = vadd.f32 %v607, %v609
        %v618 = vrot.slane %v617, 4
        %v619 = vadd.f32 %v617, %v618
        %v620 = vrot.slane %v619, 2
        %v621 = vadd.f32 %v619, %v620
        %v622 = vrot.slane %v621, 1
        %v623 = vadd.f32 %v621, %v622
        %625 = vset.pattern.permute.xlu0 0
        %626 = vperm.xlu0 %625, %v593
        %v627 = vpop.permute.xlu0 %626
        %v629 = vadd.f32 %v616, %v627
        %v630 = vadd.f32 %v623, %v627
        %v631 = vxor.u32 %v629, 2147483648
        %v632 = vxor.u32 %v630, 2147483648
        %v633 = vmul.f32 %v631, 1.442695
        %v634 = vpow.pop %v633
        %v635 = vmul.f32 %v632, 1.442695
        %v636 = vpow.pop %v635
        %v637 = vadd.f32 %v634, 1.0
        %v638 = vadd.f32 %v636, 1.0
        %v639 = vrcp.pop %v637
        %v640 = vmul.f32 1.0, %v639
        %v641 = vrcp.pop %v638
        %v642 = vmul.f32 1.0, %v641
        %v645 = vcombine.low %v640, %v642
        %v647 = vunpack.c.l.s4 1966171168
        %v648 = vunpack.c.0.s8 %v647
        %v649 = vlaneseq
        %v650 = vshrl.u32 %v649, 7
        %v651 = vsub.s32 %v648, %v650
        %v652 = vrot.slane %v645, %v651
        %v654 = vunpack.c.l.s4 1966171168
        %v655 = vunpack.c.0.s8 %v654
        %v656 = vlaneseq
        %v657 = vshrl.u32 %v656, 7
        %v658 = vsub.s32 %v655, %v657
        %v659 = vrot.slane %v652, %v658
        %v661 = vlaneseq
        %vm662 = vcmp.ge.s32.totalorder %v661, 0
        %vm663 = vcmp.lt.s32.totalorder %v661, 256
        %vm664 = vmand %vm662, %vm663
        %665 = vst.msk [vmem:[%s218] sm:$0x3] %vm664, %v659
        %s666 = sand.u32 %s137, 1
        %s667 = scalar_lea.sflag [#allocation3], %s666
        %s668 = sand.u32 %s137, 1
        %s669 = smul.addr %s668, 2
        %s670 = scalar_lea.vmem [#allocation2], %s669
        // Predicated region
        $region41: #{tpu_custom_call.1} parent=39 // pred_check
          %p671 = pneg %p147
        $region42: #{tpu_custom_call.1} parent=39 // pred_check_branch
          %673 = sbr.rel (%p671) target = $region44
        $region43: #{tpu_custom_call.1} parent=39 // pred_region
          %s674 = smul.u32 2, %s19
          %s676 = ssub.s32 32, 32
          %677 = vsyncadd %s667, %s676
          %s678 = smul.addr %s674, 16
          %s679 = scalar_lea.hbm %s5, %s678
          %s681 = sshll.u32 %s670, 4
          %s682 = int_to_ptr.vmem [resolvable:$true] %s681
          %684 = dma.vmem_to_hbm [thread:$0]  %s682, 32, %s679, %s667
        $region44: #{tpu_custom_call.1} parent=39 // pred_fallthru
          _
      $region40: #{tpu_custom_call.1} parent=5 // pred_fallthru
        _
      %p685 = scmp.le.s32.totalorder 2, %s14
      // Predicated region
      $region45: #{tpu_custom_call.1} parent=5 // pred_check
        %p686 = pneg %p685
      $region46: #{tpu_custom_call.1} parent=5 // pred_check_branch
        %688 = sbr.rel (%p686) target = $region48
      $region47: #{tpu_custom_call.1} parent=5 // pred_region
        %s689 = ssub.s32 %s14, 2
        // Predicated region
        $region49: #{tpu_custom_call.1} parent=47 // pred_check
          %p690 = pneg %p153
        $region50: #{tpu_custom_call.1} parent=47 // pred_check_branch
          %692 = sbr.rel (%p690) target = $region52
        $region51: #{tpu_custom_call.1} parent=47 // pred_region
          %s693 = sand.u32 %s138, 1
          %s694 = scalar_lea.sflag [#allocation3], %s693
          %s695 = sand.u32 %s138, 1
          %s696 = smul.addr %s695, 2
          %s697 = scalar_lea.vmem [#allocation2], %s696
          %698 = dma.done %s694, 32
        $region52: #{tpu_custom_call.1} parent=47 // pred_fallthru
          _
      $region48: #{tpu_custom_call.1} parent=5 // pred_fallthru
        _
    $region6: #{tpu_custom_call.1} parent=1 // loop_footer
      %s18 = sadd.s32 1, %s14
    $region7: #{tpu_custom_call.1} parent=1 // loop_footer_branch
      %13 = sbr.rel target = $region3
    $region8: #{tpu_custom_call.1} parent=1 // loop_exit
      _
    %699 = vsyncpa [#allocation3], 1
    %s700 = scalar_lea.sflag [#allocation3], 1
    %701 = vsyncpa %s700, 1

</llo_original>
